<compile_context>
chip_gen: v7x
topology: tpu7x:2x2x1
jax: 0.10.0
libtpu: 0.0.40
codegen_flags: <defaults>
</compile_context>

<pallas_src>
import math
import jax
import jax.numpy as jnp
from jax.experimental import pallas as pl
from jax.experimental.pallas import tpu as pltpu


TILE_B = 4096                    # batch rows per grid step (sweepable 2048-8192)
LANE = 128                       # lane width; w3/b3 padded to this for compute only
VMEM_LIMIT_BYTES = 48 * 1024 * 1024   # above v5e's 16 MiB scoped default, < v7x 64 MiB


def ppo_actor_kernel(x_ref, w1_ref, b1_ref, w2_ref, b2_ref, w3_ref, b3_ref, mu_ref):
    """One batch tile of the forward pass: Linear->Tanh->Linear->Tanh->Linear.

    Weights/biases are whole-array blocks (index_map (0,0) every grid step), so
    they stay VMEM-resident across batch tiles. Only x / mu tiles stream.
    The third weight is lane-padded to 128 columns for the VMEM compute, but only
    the first out_dim columns of mu are stored (mu_ref's last dim is out_dim), so
    the HBM writeback is the narrow, unpadded result.
    """
    x = x_ref[...]
    h1 = jnp.tanh(
        jnp.dot(x, w1_ref[...], preferred_element_type=jnp.float32) + b1_ref[...]
    )
    h2 = jnp.tanh(
        jnp.dot(h1, w2_ref[...], preferred_element_type=jnp.float32) + b2_ref[...]
    )
    mu = jnp.dot(h2, w3_ref[...], preferred_element_type=jnp.float32) + b3_ref[...]
    out_dim = mu_ref.shape[-1]
    mu_ref[...] = mu[:, :out_dim].astype(mu_ref.dtype)


def ppo_actor_forward(x, params, tile_b=TILE_B):
    """Calls the Pallas kernel. Returns (mu, std), matching PPOActor.forward."""
    (w1, b1), (w2, b2), (w3, b3) = params
    batch, in_dim = x.shape
    hidden = w1.shape[1]
    out_dim = w3.shape[1]

    # Pad only the final layer's weight/bias to a multiple of 128 lanes for the
    # in-VMEM compute (tiny: 32x128 f32). The HBM output stays (batch, out_dim).
    out_pad = max(LANE, pl.cdiv(out_dim, LANE) * LANE)
    w3p = jnp.zeros((hidden, out_pad), w3.dtype).at[:, :out_dim].set(w3)
    b3p = jnp.zeros((1, out_pad), b3.dtype).at[:, :out_dim].set(b3)

    # Batch tiling: single full-array block for small batches, otherwise 4096-row
    # tiles with a ragged (masked) last block -- no jnp.pad / slice passes over x.
    tile_b = min(tile_b, batch)
    grid = (pl.cdiv(batch, tile_b),)

    mu = pl.pallas_call(
        ppo_actor_kernel,
        out_shape=jax.ShapeDtypeStruct((batch, out_dim), jnp.float32),
        grid_spec=pl.GridSpec(
            grid=grid,
            in_specs=[
                pl.BlockSpec((tile_b, in_dim), lambda i: (i, 0)),   # x tile streams
                pl.BlockSpec((in_dim, hidden), lambda i: (0, 0)),   # weights resident
                pl.BlockSpec((1, hidden), lambda i: (0, 0)),
                pl.BlockSpec((hidden, hidden), lambda i: (0, 0)),
                pl.BlockSpec((1, hidden), lambda i: (0, 0)),
                pl.BlockSpec((hidden, out_pad), lambda i: (0, 0)),
                pl.BlockSpec((1, out_pad), lambda i: (0, 0)),
            ],
            out_specs=pl.BlockSpec((tile_b, out_dim), lambda i: (i, 0)),
        ),
        compiler_params=pltpu.CompilerParams(
            dimension_semantics=("parallel",),   # dual-TC split on v7x
            vmem_limit_bytes=VMEM_LIMIT_BYTES,
        ),
    )(x, w1, b1, w2, b2, w3p, b3p)

    # Spec hard-codes log_std = zeros_like(mu) -> std = exp(0) = 1; constant,
    # so it is produced here (XLA folds it) rather than written from the kernel.
    std = jnp.ones_like(mu)
    return mu, std


def init_linear(key, fan_in, fan_out):
    """Deterministic init mimicking nn.Linear's uniform(-1/sqrt(fan_in), 1/sqrt(fan_in)).

    Weight is stored as [fan_in, fan_out] (transposed vs. PyTorch's [out, in])."""
    kw, kb = jax.random.split(key)
    bound = 1.0 / math.sqrt(fan_in)
    w = jax.random.uniform(kw, (fan_in, fan_out), jnp.float32, -bound, bound)
    b = jax.random.uniform(kb, (1, fan_out), jnp.float32, -bound, bound)
    return w, b


def reference_forward(x, params):
    """Plain-JAX reference for correctness checking."""
    (w1, b1), (w2, b2), (w3, b3) = params
    h = jnp.tanh(x @ w1 + b1)
    h = jnp.tanh(h @ w2 + b2)
    mu = h @ w3 + b3
    std = jnp.ones_like(mu)
    return mu, std


if __name__ == "__main__":
    # Walker2d-ish shapes: obs dim 17, action dim 6, hidden 32, 3 layers.
    input_dim = 17
    output_dim = 6
    hidden_size = 32

    key = jax.random.PRNGKey(0)
    kx, k1, k2, k3, kbig = jax.random.split(key, 5)

    params = (
        init_linear(k1, input_dim, hidden_size),
        init_linear(k2, hidden_size, hidden_size),
        init_linear(k3, hidden_size, output_dim),
    )

    # Small batch (single-block path).
    batch = 2
    x = jax.random.normal(kx, (batch, input_dim), jnp.float32)
    mu, std = ppo_actor_forward(x, params)
    jax.block_until_ready((mu, std))
    mu_ref, std_ref = reference_forward(x, params)
    assert mu.shape == (batch, output_dim)
    assert std.shape == (batch, output_dim)
    assert jnp.allclose(mu, mu_ref, atol=1e-5, rtol=1e-5)
    assert jnp.allclose(std, std_ref)

    # Rollout-scale batch: exercises the multi-step grid with a ragged last block
    # (10000 = 2 * 4096 + 1808).
    big_batch = 10000
    xb = jax.random.normal(kbig, (big_batch, input_dim), jnp.float32)
    mu_b, std_b = ppo_actor_forward(xb, params)
    jax.block_until_ready((mu_b, std_b))
    mu_b_ref, std_b_ref = reference_forward(xb, params)
    assert mu_b.shape == (big_batch, output_dim)
    assert jnp.allclose(mu_b, mu_b_ref, atol=1e-5, rtol=1e-5)
    assert jnp.allclose(std_b, std_b_ref)

    print("KERNEL_OK")
</pallas_src>

<mosaic_0001>
module attributes {stable_mosaic.version = 11 : i64} {
  func.func @ppo_actor_kernel(%arg0: i32, %arg1: memref<2x17xf32, #tpu.memory_space<vmem>>, %arg2: memref<17x32xf32, #tpu.memory_space<vmem>>, %arg3: memref<1x32xf32, #tpu.memory_space<vmem>>, %arg4: memref<32x32xf32, #tpu.memory_space<vmem>>, %arg5: memref<1x32xf32, #tpu.memory_space<vmem>>, %arg6: memref<32x128xf32, #tpu.memory_space<vmem>>, %arg7: memref<1x128xf32, #tpu.memory_space<vmem>>, %arg8: memref<2x6xf32, #tpu.memory_space<vmem>>) attributes {dimension_semantics = [#tpu.dimension_semantics<parallel>], iteration_bounds = array<i64: 1>, scalar_prefetch = 0 : i64, scratch_operands = 0 : i64, tpu.core_type = #tpu.core_type<tc>, window_params = [{transform_indices = @transform_0, window_bounds = array<i64: 2, 17>}, {pipeline_mode = #tpu.pipeline_mode<synchronous>, transform_indices = @transform_1, window_bounds = array<i64: 17, 32>}, {pipeline_mode = #tpu.pipeline_mode<synchronous>, transform_indices = @transform_2, window_bounds = array<i64: 1, 32>}, {pipeline_mode = #tpu.pipeline_mode<synchronous>, transform_indices = @transform_3, window_bounds = array<i64: 32, 32>}, {pipeline_mode = #tpu.pipeline_mode<synchronous>, transform_indices = @transform_4, window_bounds = array<i64: 1, 32>}, {pipeline_mode = #tpu.pipeline_mode<synchronous>, transform_indices = @transform_5, window_bounds = array<i64: 32, 128>}, {pipeline_mode = #tpu.pipeline_mode<synchronous>, transform_indices = @transform_6, window_bounds = array<i64: 1, 128>}, {transform_indices = @transform_7, window_bounds = array<i64: 2, 6>}]} {
    %c0 = arith.constant 0 : index
    %c0_0 = arith.constant 0 : index
    %0 = vector.load %arg1[%c0, %c0_0] : memref<2x17xf32, #tpu.memory_space<vmem>>, vector<2x17xf32>
    %c0_1 = arith.constant 0 : index
    %c0_2 = arith.constant 0 : index
    %1 = vector.load %arg2[%c0_1, %c0_2] : memref<17x32xf32, #tpu.memory_space<vmem>>, vector<17x32xf32>
    %cst = arith.constant dense<0.000000e+00> : vector<2x32xf32>
    %2 = tpu.matmul %0, %1, %cst {dimension_numbers = #tpu.dot_dimension_numbers<[1], [0], [0], [1], [0, 0, 1, 1], [], []>} : vector<2x17xf32>, vector<17x32xf32>, vector<2x32xf32> -> vector<2x32xf32>
    %c0_3 = arith.constant 0 : index
    %c0_4 = arith.constant 0 : index
    %3 = vector.load %arg3[%c0_3, %c0_4] : memref<1x32xf32, #tpu.memory_space<vmem>>, vector<1x32xf32>
    %4 = vector.broadcast %3 : vector<1x32xf32> to vector<2x32xf32>
    %5 = arith.addf %2, %4 : vector<2x32xf32>
    %6 = math.tanh %5 : vector<2x32xf32>
    %c0_5 = arith.constant 0 : index
    %c0_6 = arith.constant 0 : index
    %7 = vector.load %arg4[%c0_5, %c0_6] : memref<32x32xf32, #tpu.memory_space<vmem>>, vector<32x32xf32>
    %cst_7 = arith.constant dense<0.000000e+00> : vector<2x32xf32>
    %8 = tpu.matmul %6, %7, %cst_7 {dimension_numbers = #tpu.dot_dimension_numbers<[1], [0], [0], [1], [0, 0, 1, 1], [], []>} : vector<2x32xf32>, vector<32x32xf32>, vector<2x32xf32> -> vector<2x32xf32>
    %c0_8 = arith.constant 0 : index
    %c0_9 = arith.constant 0 : index
    %9 = vector.load %arg5[%c0_8, %c0_9] : memref<1x32xf32, #tpu.memory_space<vmem>>, vector<1x32xf32>
    %10 = vector.broadcast %9 : vector<1x32xf32> to vector<2x32xf32>
    %11 = arith.addf %8, %10 : vector<2x32xf32>
    %12 = math.tanh %11 : vector<2x32xf32>
    %c0_10 = arith.constant 0 : index
    %c0_11 = arith.constant 0 : index
    %13 = vector.load %arg6[%c0_10, %c0_11] : memref<32x128xf32, #tpu.memory_space<vmem>>, vector<32x128xf32>
    %cst_12 = arith.constant dense<0.000000e+00> : vector<2x128xf32>
    %14 = tpu.matmul %12, %13, %cst_12 {dimension_numbers = #tpu.dot_dimension_numbers<[1], [0], [0], [1], [0, 0, 1, 1], [], []>} : vector<2x32xf32>, vector<32x128xf32>, vector<2x128xf32> -> vector<2x128xf32>
    %c0_13 = arith.constant 0 : index
    %c0_14 = arith.constant 0 : index
    %15 = vector.load %arg7[%c0_13, %c0_14] : memref<1x128xf32, #tpu.memory_space<vmem>>, vector<1x128xf32>
    %16 = vector.broadcast %15 : vector<1x128xf32> to vector<2x128xf32>
    %17 = arith.addf %14, %16 : vector<2x128xf32>
    %18 = vector.extract_strided_slice %17 {offsets = [0, 0], sizes = [2, 6], strides = [1, 1]} : vector<2x128xf32> to vector<2x6xf32>
    %c0_15 = arith.constant 0 : index
    %c0_16 = arith.constant 0 : index
    %19 = vector.load %arg8[%c0_15, %c0_16] : memref<2x6xf32, #tpu.memory_space<vmem>>, vector<2x6xf32>
    tpu.vector_store %arg8[%c0_15, %c0_16], %18 {strides = array<i32>} : memref<2x6xf32, #tpu.memory_space<vmem>>, vector<2x6xf32>,
    return
  }
  func.func @transform_0(%arg0: i32) -> (i32, i32) {
    %c0_i32 = arith.constant 0 : i32
    %c0_i32_0 = arith.constant 0 : i32
    return %arg0, %c0_i32 : i32, i32
  }
  func.func @transform_1(%arg0: i32) -> (i32, i32) {
    %c0_i32 = arith.constant 0 : i32
    %c0_i32_0 = arith.constant 0 : i32
    %c0_i32_1 = arith.constant 0 : i32
    return %c0_i32, %c0_i32_0 : i32, i32
  }
  func.func @transform_2(%arg0: i32) -> (i32, i32) {
    %c0_i32 = arith.constant 0 : i32
    %c0_i32_0 = arith.constant 0 : i32
    %c0_i32_1 = arith.constant 0 : i32
    return %c0_i32, %c0_i32_0 : i32, i32
  }
  func.func @transform_3(%arg0: i32) -> (i32, i32) {
    %c0_i32 = arith.constant 0 : i32
    %c0_i32_0 = arith.constant 0 : i32
    %c0_i32_1 = arith.constant 0 : i32
    return %c0_i32, %c0_i32_0 : i32, i32
  }
  func.func @transform_4(%arg0: i32) -> (i32, i32) {
    %c0_i32 = arith.constant 0 : i32
    %c0_i32_0 = arith.constant 0 : i32
    %c0_i32_1 = arith.constant 0 : i32
    return %c0_i32, %c0_i32_0 : i32, i32
  }
  func.func @transform_5(%arg0: i32) -> (i32, i32) {
    %c0_i32 = arith.constant 0 : i32
    %c0_i32_0 = arith.constant 0 : i32
    %c0_i32_1 = arith.constant 0 : i32
    return %c0_i32, %c0_i32_0 : i32, i32
  }
  func.func @transform_6(%arg0: i32) -> (i32, i32) {
    %c0_i32 = arith.constant 0 : i32
    %c0_i32_0 = arith.constant 0 : i32
    %c0_i32_1 = arith.constant 0 : i32
    return %c0_i32, %c0_i32_0 : i32, i32
  }
  func.func @transform_7(%arg0: i32) -> (i32, i32) {
    %c0_i32 = arith.constant 0 : i32
    %c0_i32_0 = arith.constant 0 : i32
    return %arg0, %c0_i32 : i32, i32
  }
}

</mosaic_0001>

<llo_original>
// kernel: tpu_custom_call.1
$region0: #{tpu_custom_call.1}
  #allocation0 [shape = 'u32[]', space=smem, size = 0x4, offset = 0x4, fixed_abs, tag = 'smem constant byte address 0x4 - core index']
  #allocation1 [shape = 'u32[144,128]{1,0:T(1,128)}', space=vmem, size = 0x12000, scoped, tag = 'internal scratch']
  %s0 = inlined_call_operand.hbm [shape: f32[2,17], index: 0, kind: input, shape index: {}]
  %s1 = inlined_call_operand.hbm [shape: f32[17,32], index: 1, kind: input, shape index: {}]
  %s2 = inlined_call_operand.vmem [shape: f32[1,32], index: 2, kind: input, shape index: {}]
  %s3 = inlined_call_operand.hbm [shape: f32[32,32], index: 3, kind: input, shape index: {}]
  %s4 = inlined_call_operand.vmem [shape: f32[1,32], index: 4, kind: input, shape index: {}]
  %s5 = inlined_call_operand.hbm [shape: f32[32,128], index: 5, kind: input, shape index: {}]
  %s6 = inlined_call_operand.vmem [shape: f32[1,128], index: 6, kind: input, shape index: {}]
  %s7 = inlined_call_operand.hbm [shape: f32[2,6], index: 7, kind: output, shape index: {}]
  %s8 = sld [smem:[#allocation0]]
  $region54: #{tpu_custom_call.1} parent=0
    _
  %s10 = ssub.s32 1, %s8
  %s11 = scalar_select 0, %s10, %s8
  $region1: #{tpu_custom_call.1} parent=0
    #allocation2 [shape = 'u8[1024]{0}', space=vmem, size = 0x400, scoped, tag = 'input window, operand 0, single buffered']
    #allocation3 [shape = 's32[1]{0}', space=sflag, size = 0x4, scoped, tag = 'scoped memory for tpu_custom_call.1']
    #allocation4 [shape = 's32[1]{0}', space=sflag, size = 0x4, scoped, tag = 'scoped memory for tpu_custom_call.1']
    #allocation5 [shape = 'u8[12288]{0}', space=vmem, size = 0x3000, scoped, tag = 'input window, operand 1, single buffered']
    #allocation6 [shape = 's32[1]{0}', space=sflag, size = 0x4, scoped, tag = 'scoped memory for tpu_custom_call.1']
    #allocation7 [shape = 'u8[16384]{0}', space=vmem, size = 0x4000, scoped, tag = 'input window, operand 3, single buffered']
    #allocation8 [shape = 'u8[16384]{0}', space=vmem, size = 0x4000, scoped, tag = 'input window, operand 5, single buffered']
    #allocation9 [shape = 's32[1]{0}', space=sflag, size = 0x4, scoped, tag = 'scoped memory for tpu_custom_call.1']
    #allocation10 [shape = 'u8[1024]{0}', space=vmem, size = 0x400, scoped, tag = 'output window, operand 0, single buffered']
    %12 = vsyncpa [#allocation3], 0
    %13 = vsyncpa [#allocation6], 0
    %14 = vsyncpa [#allocation9], 0
    %15 = vsyncpa [#allocation4], 0
    // Predicated region
    $region2: #{tpu_custom_call.1} parent=1 // pred_check
      _
    $region3: #{tpu_custom_call.1} parent=1 // pred_check_branch
      %17 = sbr.rel (0) target = $region5
    $region4: #{tpu_custom_call.1} parent=1 // pred_region
      %s19 = ssub.s32 32, 32
      %20 = vsyncadd [#allocation3], %s19
      %s22 = sshll.u32 [#allocation2], 4
      %s23 = int_to_ptr.vmem [resolvable:$true] %s22
      %25 = dma.hbm_to_vmem [thread:$0]  %s0, 32, %s23, [#allocation3]
    $region5: #{tpu_custom_call.1} parent=1 // pred_fallthru
      _
    // Predicated region
    $region6: #{tpu_custom_call.1} parent=1 // pred_check
      _
    $region7: #{tpu_custom_call.1} parent=1 // pred_check_branch
      %27 = sbr.rel (0) target = $region9
    $region8: #{tpu_custom_call.1} parent=1 // pred_region
      %s29 = ssub.s32 384, 384
      %30 = vsyncadd [#allocation6], %s29
      %s31 = sshll.u32 [#allocation5], 4
      %s32 = int_to_ptr.vmem [resolvable:$true] %s31
      %37 = dma.hbm_to_vmem [thread:$0]  %s1, 384, %s32, [#allocation6], 128, 128, 8
    $region9: #{tpu_custom_call.1} parent=1 // pred_fallthru
      _
    // Predicated region
    $region10: #{tpu_custom_call.1} parent=1 // pred_check
      _
    $region11: #{tpu_custom_call.1} parent=1 // pred_check_branch
      %39 = sbr.rel (0) target = $region13
    $region12: #{tpu_custom_call.1} parent=1 // pred_region
      _
    $region13: #{tpu_custom_call.1} parent=1 // pred_fallthru
      _
    // Predicated region
    $region14: #{tpu_custom_call.1} parent=1 // pred_check
      _
    $region15: #{tpu_custom_call.1} parent=1 // pred_check_branch
      %41 = sbr.rel (0) target = $region17
    $region16: #{tpu_custom_call.1} parent=1 // pred_region
      %s43 = ssub.s32 512, 512
      %44 = vsyncadd [#allocation6], %s43
      %s45 = sshll.u32 [#allocation7], 4
      %s46 = int_to_ptr.vmem [resolvable:$true] %s45
      %51 = dma.hbm_to_vmem [thread:$0]  %s3, 512, %s46, [#allocation6], 128, 128, 8
    $region17: #{tpu_custom_call.1} parent=1 // pred_fallthru
      _
    // Predicated region
    $region18: #{tpu_custom_call.1} parent=1 // pred_check
      _
    $region19: #{tpu_custom_call.1} parent=1 // pred_check_branch
      %53 = sbr.rel (0) target = $region21
    $region20: #{tpu_custom_call.1} parent=1 // pred_region
      _
    $region21: #{tpu_custom_call.1} parent=1 // pred_fallthru
      _
    // Predicated region
    $region22: #{tpu_custom_call.1} parent=1 // pred_check
      _
    $region23: #{tpu_custom_call.1} parent=1 // pred_check_branch
      %55 = sbr.rel (0) target = $region25
    $region24: #{tpu_custom_call.1} parent=1 // pred_region
      %s57 = ssub.s32 512, 512
      %58 = vsyncadd [#allocation9], %s57
      %s59 = sshll.u32 [#allocation8], 4
      %s60 = int_to_ptr.vmem [resolvable:$true] %s59
      %65 = dma.hbm_to_vmem [thread:$0]  %s5, 512, %s60, [#allocation9], 128, 128, 8
    $region25: #{tpu_custom_call.1} parent=1 // pred_fallthru
      _
    // Predicated region
    $region26: #{tpu_custom_call.1} parent=1 // pred_check
      _
    $region27: #{tpu_custom_call.1} parent=1 // pred_check_branch
      %67 = sbr.rel (0) target = $region29
    $region28: #{tpu_custom_call.1} parent=1 // pred_region
      _
    $region29: #{tpu_custom_call.1} parent=1 // pred_fallthru
      _
    // Predicated region
    $region30: #{tpu_custom_call.1} parent=1 // pred_check
      _
    $region31: #{tpu_custom_call.1} parent=1 // pred_check_branch
      %69 = sbr.rel (0) target = $region33
    $region32: #{tpu_custom_call.1} parent=1 // pred_region
      %70 = dma.done [#allocation3], 32
    $region33: #{tpu_custom_call.1} parent=1 // pred_fallthru
      _
    // Predicated region
    $region34: #{tpu_custom_call.1} parent=1 // pred_check
      _
    $region35: #{tpu_custom_call.1} parent=1 // pred_check_branch
      %72 = sbr.rel (0) target = $region37
    $region36: #{tpu_custom_call.1} parent=1 // pred_region
      %73 = dma.done [#allocation6], 384
    $region37: #{tpu_custom_call.1} parent=1 // pred_fallthru
      _
    // Predicated region
    $region38: #{tpu_custom_call.1} parent=1 // pred_check
      _
    $region39: #{tpu_custom_call.1} parent=1 // pred_check_branch
      %75 = sbr.rel (0) target = $region41
    $region40: #{tpu_custom_call.1} parent=1 // pred_region
      %76 = dma.done [#allocation6], 512
    $region41: #{tpu_custom_call.1} parent=1 // pred_fallthru
      _
    // Predicated region
    $region42: #{tpu_custom_call.1} parent=1 // pred_check
      _
    $region43: #{tpu_custom_call.1} parent=1 // pred_check_branch
      %78 = sbr.rel (0) target = $region45
    $region44: #{tpu_custom_call.1} parent=1 // pred_region
      %79 = dma.done [#allocation9], 512
    $region45: #{tpu_custom_call.1} parent=1 // pred_fallthru
      _
    %v80 = vld [vmem:[#allocation2] sm:$0x3]
    %v81 = vld [vmem:[#allocation5] sm:$0xff]
    %v82 = vld [vmem:[#allocation5 + $0x8] sm:$0xff]
    %v83 = vld [vmem:[#allocation5 + $0x10] sm:$0x1]
    %v84 = vld [vmem:[%s2] sm:$0x1]
    %v86 = vlaneseq
    %v87 = vshrl.u32 %v86, 7
    %v88 = vsub.s32 0, %v87
    %v89 = vrot.slane %v84, %v88
    %vm91 = vcmask 138240
    %v93 = vsel %vm91, %v80, 0
    %vm95 = vcmask 1040384
    %v97 = vsel %vm95, %v83, 0
    %99 = vmatprep.subr.mxu0 0.0
    %100 = vmatpush1.msra.mxu0 %v81
    %101 = vmatprep.subr.mxu0 0.0
    %102 = vmatpush1.msra.mxu0 %v82
    %103 = vmatprep.subr.mxu0 0.0
    %104 = vmatpush1.msra.mxu0 %v97
    %105 = vmatprep.subr.mxu0 0.0
    %106 = vmatpush1.msra.mxu0 0.0
    %107 = vmatprep.subr.mxu0 0.0
    %108 = vmatpush1.msra.mxu0 0.0
    %109 = vmatprep.subr.mxu0 0.0
    %110 = vmatpush1.msra.mxu0 0.0
    %111 = vmatprep.subr.mxu0 0.0
    %112 = vmatpush1.msra.mxu0 0.0
    %113 = vmatprep.subr.mxu0 0.0
    %114 = vmatpush1.msra.mxu0 0.0
    %115 = vmatprep.subr.mxu0 0.0
    %116 = vmatpush1.msra.mxu0 0.0
    %117 = vmatprep.subr.mxu0 0.0
    %118 = vmatpush1.msra.mxu0 0.0
    %119 = vmatprep.subr.mxu0 0.0
    %120 = vmatpush1.msra.mxu0 0.0
    %121 = vmatprep.subr.mxu0 0.0
    %122 = vmatpush1.msra.mxu0 0.0
    %123 = vmatprep.subr.mxu0 0.0
    %124 = vmatpush1.msra.mxu0 0.0
    %125 = vmatprep.subr.mxu0 0.0
    %126 = vmatpush1.msra.mxu0 0.0
    %127 = vmatprep.subr.mxu0 0.0
    %128 = vmatpush1.msra.mxu0 0.0
    %129 = vmatprep.subr.mxu0 0.0
    %130 = vmatpush1.msra.mxu0 0.0
    %131 = vmatprep.subr.mxu0 0.0
    %132 = vmatpush1.msra.mxu0 0.0
    %133 = vmatprep.subr.mxu0 0.0
    %134 = vmatpush1.msra.mxu0 0.0
    %135 = vmatprep.subr.mxu0 0.0
    %136 = vmatpush1.msra.mxu0 0.0
    %137 = vmatprep.subr.mxu0 0.0
    %138 = vmatpush1.msra.mxu0 0.0
    %139 = vmatprep.subr.mxu0 0.0
    %140 = vmatpush1.msra.mxu0 0.0
    %141 = vmatprep.subr.mxu0 0.0
    %142 = vmatpush1.msra.mxu0 0.0
    %143 = vmatprep.subr.mxu0 0.0
    %144 = vmatpush1.msra.mxu0 0.0
    %145 = vmatprep.subr.mxu0 0.0
    %146 = vmatpush1.msra.mxu0 0.0
    %147 = vmatprep.subr.mxu0 0.0
    %148 = vmatpush1.msra.mxu0 0.0
    %149 = vmatprep.subr.mxu0 0.0
    %150 = vmatpush1.msra.mxu0 0.0
    %151 = vmatprep.subr.mxu0 0.0
    %152 = vmatpush1.msra.mxu0 0.0
    %153 = vmatprep.subr.mxu0 0.0
    %154 = vmatpush1.msra.mxu0 0.0
    %155 = vmatprep.subr.mxu0 0.0
    %156 = vmatpush1.msra.mxu0 0.0
    %157 = vmatprep.subr.mxu0 0.0
    %158 = vmatpush1.msra.mxu0 0.0
    %159 = vmatprep.subr.mxu0 0.0
    %160 = vmatpush1.msra.mxu0 0.0
    %161 = vmatprep.subr.mxu0 0.0
    %162 = vmatpush1.msra.mxu0 0.0
    %163 = vmatprep.mubr.f32.mxu0 0.0
    %164 = vmatmul.mubr.f32.gmra.mrb[0].mxu0 %v93
    %v165 = vpop.f32.mrb[0].mxu0
    %v166 = vadd.f32 %v89, %v165
    %v167 = vpop.f32.mrb[0].mxu0
    %168 = vdwg.mxu0
    %v169 = vtanh.pop %v166
    %v170 = vld [vmem:[#allocation7] sm:$0xff]
    %v171 = vld [vmem:[#allocation7 + $0x8] sm:$0xff]
    %v172 = vld [vmem:[#allocation7 + $0x10] sm:$0xff]
    %v173 = vld [vmem:[#allocation7 + $0x18] sm:$0xff]
    %v174 = vld [vmem:[%s4] sm:$0x1]
    %v176 = vlaneseq
    %v177 = vshrl.u32 %v176, 7
    %v178 = vsub.s32 0, %v177
    %v179 = vrot.slane %v174, %v178
    %vm181 = vcmask 261120
    %v183 = vsel %vm181, %v169, 0
    %185 = vmatprep.subr.mxu0 0.0
    %186 = vmatpush1.msra.mxu0 %v170
    %187 = vmatprep.subr.mxu0 0.0
    %188 = vmatpush1.msra.mxu0 %v171
    %189 = vmatprep.subr.mxu0 0.0
    %190 = vmatpush1.msra.mxu0 %v172
    %191 = vmatprep.subr.mxu0 0.0
    %192 = vmatpush1.msra.mxu0 %v173
    %193 = vmatprep.subr.mxu0 0.0
    %194 = vmatpush1.msra.mxu0 0.0
    %195 = vmatprep.subr.mxu0 0.0
    %196 = vmatpush1.msra.mxu0 0.0
    %197 = vmatprep.subr.mxu0 0.0
    %198 = vmatpush1.msra.mxu0 0.0
    %199 = vmatprep.subr.mxu0 0.0
    %200 = vmatpush1.msra.mxu0 0.0
    %201 = vmatprep.subr.mxu0 0.0
    %202 = vmatpush1.msra.mxu0 0.0
    %203 = vmatprep.subr.mxu0 0.0
    %204 = vmatpush1.msra.mxu0 0.0
    %205 = vmatprep.subr.mxu0 0.0
    %206 = vmatpush1.msra.mxu0 0.0
    %207 = vmatprep.subr.mxu0 0.0
    %208 = vmatpush1.msra.mxu0 0.0
    %209 = vmatprep.subr.mxu0 0.0
    %210 = vmatpush1.msra.mxu0 0.0
    %211 = vmatprep.subr.mxu0 0.0
    %212 = vmatpush1.msra.mxu0 0.0
    %213 = vmatprep.subr.mxu0 0.0
    %214 = vmatpush1.msra.mxu0 0.0
    %215 = vmatprep.subr.mxu0 0.0
    %216 = vmatpush1.msra.mxu0 0.0
    %217 = vmatprep.subr.mxu0 0.0
    %218 = vmatpush1.msra.mxu0 0.0
    %219 = vmatprep.subr.mxu0 0.0
    %220 = vmatpush1.msra.mxu0 0.0
    %221 = vmatprep.subr.mxu0 0.0
    %222 = vmatpush1.msra.mxu0 0.0
    %223 = vmatprep.subr.mxu0 0.0
    %224 = vmatpush1.msra.mxu0 0.0
    %225 = vmatprep.subr.mxu0 0.0
    %226 = vmatpush1.msra.mxu0 0.0
    %227 = vmatprep.subr.mxu0 0.0
    %228 = vmatpush1.msra.mxu0 0.0
    %229 = vmatprep.subr.mxu0 0.0
    %230 = vmatpush1.msra.mxu0 0.0
    %231 = vmatprep.subr.mxu0 0.0
    %232 = vmatpush1.msra.mxu0 0.0
    %233 = vmatprep.subr.mxu0 0.0
    %234 = vmatpush1.msra.mxu0 0.0
    %235 = vmatprep.subr.mxu0 0.0
    %236 = vmatpush1.msra.mxu0 0.0
    %237 = vmatprep.subr.mxu0 0.0
    %238 = vmatpush1.msra.mxu0 0.0
    %239 = vmatprep.subr.mxu0 0.0
    %240 = vmatpush1.msra.mxu0 0.0
    %241 = vmatprep.subr.mxu0 0.0
    %242 = vmatpush1.msra.mxu0 0.0
    %243 = vmatprep.subr.mxu0 0.0
    %244 = vmatpush1.msra.mxu0 0.0
    %245 = vmatprep.subr.mxu0 0.0
    %246 = vmatpush1.msra.mxu0 0.0
    %247 = vmatprep.subr.mxu0 0.0
    %248 = vmatpush1.msra.mxu0 0.0
    %249 = vmatprep.mubr.f32.mxu0 0.0
    %250 = vmatmul.mubr.f32.gmra.mrb[0].mxu0 %v183
    %v251 = vpop.f32.mrb[0].mxu0
    %v252 = vadd.f32 %v179, %v251
    %v253 = vpop.f32.mrb[0].mxu0
    %254 = vdwg.mxu0
    %v255 = vtanh.pop %v252
    %v256 = vld [vmem:[#allocation8] sm:$0xff]
    %v257 = vld [vmem:[#allocation8 + $0x8] sm:$0xff]
    %v258 = vld [vmem:[#allocation8 + $0x10] sm:$0xff]
    %v259 = vld [vmem:[#allocation8 + $0x18] sm:$0xff]
    %v260 = vld [vmem:[%s6] sm:$0x1]
    %v262 = vlaneseq
    %v263 = vshrl.u32 %v262, 7
    %v264 = vsub.s32 0, %v263
    %v265 = vrot.slane %v260, %v264
    %v268 = vsel %vm181, %v255, 0
    %270 = vmatprep.subr.mxu0 0.0
    %271 = vmatpush1.msra.mxu0 %v256
    %272 = vmatprep.subr.mxu0 0.0
    %273 = vmatpush1.msra.mxu0 %v257
    %274 = vmatprep.subr.mxu0 0.0
    %275 = vmatpush1.msra.mxu0 %v258
    %276 = vmatprep.subr.mxu0 0.0
    %277 = vmatpush1.msra.mxu0 %v259
    %278 = vmatprep.subr.mxu0 0.0
    %279 = vmatpush1.msra.mxu0 0.0
    %280 = vmatprep.subr.mxu0 0.0
    %281 = vmatpush1.msra.mxu0 0.0
    %282 = vmatprep.subr.mxu0 0.0
    %283 = vmatpush1.msra.mxu0 0.0
    %284 = vmatprep.subr.mxu0 0.0
    %285 = vmatpush1.msra.mxu0 0.0
    %286 = vmatprep.subr.mxu0 0.0
    %287 = vmatpush1.msra.mxu0 0.0
    %288 = vmatprep.subr.mxu0 0.0
    %289 = vmatpush1.msra.mxu0 0.0
    %290 = vmatprep.subr.mxu0 0.0
    %291 = vmatpush1.msra.mxu0 0.0
    %292 = vmatprep.subr.mxu0 0.0
    %293 = vmatpush1.msra.mxu0 0.0
    %294 = vmatprep.subr.mxu0 0.0
    %295 = vmatpush1.msra.mxu0 0.0
    %296 = vmatprep.subr.mxu0 0.0
    %297 = vmatpush1.msra.mxu0 0.0
    %298 = vmatprep.subr.mxu0 0.0
    %299 = vmatpush1.msra.mxu0 0.0
    %300 = vmatprep.subr.mxu0 0.0
    %301 = vmatpush1.msra.mxu0 0.0
    %302 = vmatprep.subr.mxu0 0.0
    %303 = vmatpush1.msra.mxu0 0.0
    %304 = vmatprep.subr.mxu0 0.0
    %305 = vmatpush1.msra.mxu0 0.0
    %306 = vmatprep.subr.mxu0 0.0
    %307 = vmatpush1.msra.mxu0 0.0
    %308 = vmatprep.subr.mxu0 0.0
    %309 = vmatpush1.msra.mxu0 0.0
    %310 = vmatprep.subr.mxu0 0.0
    %311 = vmatpush1.msra.mxu0 0.0
    %312 = vmatprep.subr.mxu0 0.0
    %313 = vmatpush1.msra.mxu0 0.0
    %314 = vmatprep.subr.mxu0 0.0
    %315 = vmatpush1.msra.mxu0 0.0
    %316 = vmatprep.subr.mxu0 0.0
    %317 = vmatpush1.msra.mxu0 0.0
    %318 = vmatprep.subr.mxu0 0.0
    %319 = vmatpush1.msra.mxu0 0.0
    %320 = vmatprep.subr.mxu0 0.0
    %321 = vmatpush1.msra.mxu0 0.0
    %322 = vmatprep.subr.mxu0 0.0
    %323 = vmatpush1.msra.mxu0 0.0
    %324 = vmatprep.subr.mxu0 0.0
    %325 = vmatpush1.msra.mxu0 0.0
    %326 = vmatprep.subr.mxu0 0.0
    %327 = vmatpush1.msra.mxu0 0.0
    %328 = vmatprep.subr.mxu0 0.0
    %329 = vmatpush1.msra.mxu0 0.0
    %330 = vmatprep.subr.mxu0 0.0
    %331 = vmatpush1.msra.mxu0 0.0
    %332 = vmatprep.subr.mxu0 0.0
    %333 = vmatpush1.msra.mxu0 0.0
    %334 = vmatprep.mubr.f32.mxu0 0.0
    %335 = vmatmul.mubr.f32.gmra.mrb[0].mxu0 %v268
    %v336 = vpop.f32.mrb[0].mxu0
    %v337 = vadd.f32 %v265, %v336
    %v338 = vpop.f32.mrb[0].mxu0
    %339 = vdwg.mxu0
    %vm340 = vcmask 41984
    %341 = vst.msk [vmem:[#allocation10] sm:$0x3] %vm340, %v337
    // Predicated region
    $region46: #{tpu_custom_call.1} parent=1 // pred_check
      _
    $region47: #{tpu_custom_call.1} parent=1 // pred_check_branch
      %343 = sbr.rel (0) target = $region49
    $region48: #{tpu_custom_call.1} parent=1 // pred_region
      %s345 = ssub.s32 32, 32
      %346 = vsyncadd [#allocation4], %s345
      %s348 = sshll.u32 [#allocation10], 4
      %s349 = int_to_ptr.vmem [resolvable:$true] %s348
      %351 = dma.vmem_to_hbm [thread:$0]  %s349, 32, %s7, [#allocation4]
    $region49: #{tpu_custom_call.1} parent=1 // pred_fallthru
      _
    // Predicated region
    $region50: #{tpu_custom_call.1} parent=1 // pred_check
      _
    $region51: #{tpu_custom_call.1} parent=1 // pred_check_branch
      %353 = sbr.rel (0) target = $region53
    $region52: #{tpu_custom_call.1} parent=1 // pred_region
      %354 = dma.done [#allocation4], 32
    $region53: #{tpu_custom_call.1} parent=1 // pred_fallthru
      _
    %355 = vsyncpa [#allocation3], 1
    %356 = vsyncpa [#allocation6], 1
    %357 = vsyncpa [#allocation9], 1
    %358 = vsyncpa [#allocation4], 1

</llo_original>
